<compile_context>
chip_gen: v7x
topology: tpu7x:2x2x1
jax: 0.10.0
libtpu: 0.0.40
codegen_flags: <defaults>
</compile_context>

<pallas_src>
import functools

import jax
import jax.numpy as jnp
from jax.experimental import pallas as pl
from jax.experimental.pallas import tpu as pltpu

LANE = 128
SUBLANE = 8
_MIB = 1024 * 1024


def _ceil_to(x, m):
    return ((x + m - 1) // m) * m


def _tpu_vmem_profile():
    """Per-generation (vmem_budget_bytes, target_rows, vmem_cap_bytes) for tile sizing."""
    try:
        info = pltpu.get_tpu_info()
        phys = int(getattr(info, "vmem_capacity_bytes", 0) or 0)
    except Exception:            # not on a TPU backend (e.g. interpret mode on CPU)
        phys = 0
    if phys >= 96 * _MIB:        # v5e / v6e: 128 MiB physical VMEM per TensorCore
        return 72 * _MIB, 512, 112 * _MIB
    if phys > 0:                 # v7x: 64 MiB physical VMEM per TensorCore
        return 28 * _MIB, 256, 56 * _MIB
    return 24 * _MIB, 256, 48 * _MIB   # unknown backend: conservative (v7x-safe) defaults


def _attention_kernel(q_ref, c_ref, bias_ref, w_in_t_ref, w_mix_t_ref, w_qp_t_ref,
                      out_ref, att_ref=None, *, apply_bias=True):
    bblk, tm, d = q_ref.shape
    bf = jnp.bfloat16

    # linear_in: fold (batch, L_out) rows into one tall-M MXU matmul (projections only;
    # the batched score/mix matmuls below keep their per-batch M = tm).
    q2 = q_ref[0] if bblk == 1 else q_ref[...].reshape(bblk * tm, d)      # bf16
    qp2 = jnp.dot(q2, w_in_t_ref[...], preferred_element_type=jnp.float32)
    qp2_b = qp2.astype(bf)
    qp = qp2_b[None] if bblk == 1 else qp2_b.reshape(bblk, tm, d)         # (bblk, tm, d)

    c = c_ref[...]                                                        # (bblk, lqp, d) bf16

    # scores[b, l, q] = sum_d qp[b, l, d] * c[b, q, d]   (no in-kernel transpose)
    scores = jnp.einsum("bld,bqd->blq", qp, c,
                        preferred_element_type=jnp.float32)               # f32
    if apply_bias:  # static: hoisted 0 / -1e30 key-padding bias
        scores = scores + bias_ref[...][None]

    # exact, numerically stable softmax in f32 (attention rows sum to 1)
    m = jnp.max(scores, axis=-1, keepdims=True)
    e = jnp.exp(scores - m)
    attn = e * (1.0 / jnp.sum(e, axis=-1, keepdims=True))

    # mix[b, l, d] = sum_q attn[b, l, q] * c[b, q, d]
    mix = jnp.einsum("blq,bqd->bld", attn.astype(bf), c,
                     preferred_element_type=jnp.float32)

    # linear_out on concat(mix, qp): concat folded into two resident-weight matmuls.
    mix_b = mix.astype(bf)
    mix2 = mix_b[0] if bblk == 1 else mix_b.reshape(bblk * tm, d)
    out2 = jnp.tanh(
        jnp.dot(mix2, w_mix_t_ref[...], preferred_element_type=jnp.float32)
        + jnp.dot(qp2_b, w_qp_t_ref[...], preferred_element_type=jnp.float32))

    if bblk == 1:
        out_ref[0] = out2.astype(out_ref.dtype)
    else:
        out_ref[...] = out2.reshape(bblk, tm, d).astype(out_ref.dtype)
    if att_ref is not None:
        att_ref[...] = attn.astype(att_ref.dtype)


def attention_general(query, context, w_in, w_out, *,
                      return_attention=True,
                      out_dtype=jnp.float32, attn_dtype=jnp.float32,
                      target_rows=None, vmem_budget_bytes=None):
    """query: (B, L_out, D); context: (B, L_q, D);
       w_in: (D, D) = linear_in.weight; w_out: (D, 2D) = linear_out.weight.
       Returns (output, attention_weights); attention_weights is None when
       return_attention=False (drops the dominant HBM writeback)."""
    B, L_out, D = query.shape
    _, L_q, _ = context.shape
    bf = jnp.bfloat16

    budget, rows, vmem_cap = _tpu_vmem_profile()
    if vmem_budget_bytes is None:
        vmem_budget_bytes = budget
    if target_rows is None:
        target_rows = rows

    # ---- host-side weight prep (glue): pre-transpose, split, cast to bf16 ----
    w_in_t = jnp.asarray(w_in).astype(bf).T                 # (D, D)  == W_in.T
    w_out_t = jnp.asarray(w_out).T                          # (2D, D) == W_out.T
    w_out_mix_t = w_out_t[:D, :].astype(bf)                 # (D, D)  mix half
    w_out_qp_t = w_out_t[D:, :].astype(bf)                  # (D, D)  query half

    # ---- tile sizing ----
    L_q_pad = max(LANE, _ceil_to(L_q, LANE))                # lane-dense attn columns
    # TODO(synk): for D < 128 and compute-bound shapes, padding D to 128 would give
    # full-lane stores and better MXU lane use for the projections (skipped: mem-bound).

    if L_out >= LANE:
        # Tall-M regime: score/mix matmuls are (TM, D) x (D, L_q_pad) per batch element;
        # batch cannot fold into M for them, so maximize TM first and keep B_BLK = 1.
        n_m = -(-L_out // target_rows)
        TM = _ceil_to(-(-L_out // n_m), SUBLANE)
        B_BLK = 1
    else:
        # Small-L_out regime (store/DMA-bound): fuse batches into one slab so the
        # projections and the DMAs see more rows per step.
        TM = _ceil_to(L_out, SUBLANE)
        B_BLK = max(1, min(B, -(-target_rows // TM)))

    out_isz = jnp.dtype(out_dtype).itemsize
    att_isz = jnp.dtype(attn_dtype).itemsize if return_attention else 0

    def _step_bytes(bblk, tm):
        q_b = bblk * tm * D * 2                        # bf16 query tile
        c_b = bblk * L_q_pad * D * 2                   # bf16 context tile
        o_b = bblk * tm * D * out_isz
        a_b = bblk * tm * L_q_pad * att_isz
        scores_f32 = bblk * tm * L_q_pad * 4           # scores / exp / attn live copies
        rows_f32 = bblk * tm * D * 4                   # qp / mix f32 intermediates
        w_b = 2 * 3 * D * D * 2                        # three (D,D) bf16 weights, double-buffered
        bias_b = 2 * L_q_pad * 4
        return (2 * (q_b + c_b + o_b + a_b)            # double-buffered I/O tiles
                + w_b + bias_b
                + 3 * scores_f32 + 2 * rows_f32)       # live f32 intermediates

    while _step_bytes(B_BLK, TM) > vmem_budget_bytes and (B_BLK > 1 or TM > SUBLANE):
        if B_BLK > 1:
            B_BLK = -(-B_BLK // 2)
        else:
            TM = max(SUBLANE, _ceil_to(TM // 2, SUBLANE))

    B_pad = _ceil_to(B, B_BLK)
    L_out_pad = _ceil_to(L_out, TM)

    # v7x megacore: guarantee >= 2 grid steps along a "parallel" axis whenever the
    # problem is splittable, so both TensorCores get work even when B == 1.
    while (B_pad // B_BLK) * (L_out_pad // TM) < 2 and (B_BLK > 1 or TM > SUBLANE):
        if B_BLK > 1:
            B_BLK = -(-B_BLK // 2)
        else:
            TM = max(SUBLANE, _ceil_to(TM // 2, SUBLANE))
        B_pad = _ceil_to(B, B_BLK)
        L_out_pad = _ceil_to(L_out, TM)

    # Explicit scoped-VMEM limit: actual per-step footprint + 20% headroom, clamped to
    # what this generation can actually provide (portable across v5e / v6e / v7x).
    vmem_limit_bytes = int(min(max(int(_step_bytes(B_BLK, TM) * 1.2), 16 * _MIB),
                               vmem_cap))

    # ---- host-side zero padding (inert: padded keys masked via the additive bias) ----
    q = jnp.pad(query.astype(bf),
                ((0, B_pad - B), (0, L_out_pad - L_out), (0, 0)))
    c = jnp.pad(context.astype(bf),
                ((0, B_pad - B), (0, L_q_pad - L_q), (0, 0)))
    col = jnp.arange(L_q_pad, dtype=jnp.int32)
    bias = jnp.where(col < L_q, 0.0, -1e30).astype(jnp.float32).reshape(1, L_q_pad)

    kernel = functools.partial(_attention_kernel, apply_bias=(L_q < L_q_pad))

    out_shapes = [jax.ShapeDtypeStruct((B_pad, L_out_pad, D), out_dtype)]
    out_specs = [pl.BlockSpec((B_BLK, TM, D), lambda b, m: (b, m, 0))]
    if return_attention:
        out_shapes.append(jax.ShapeDtypeStruct((B_pad, L_out_pad, L_q_pad), attn_dtype))
        out_specs.append(pl.BlockSpec((B_BLK, TM, L_q_pad), lambda b, m: (b, m, 0)))

    results = pl.pallas_call(
        kernel,
        out_shape=tuple(out_shapes),
        grid_spec=pltpu.PrefetchScalarGridSpec(
            num_scalar_prefetch=0,
            grid=(B_pad // B_BLK, L_out_pad // TM),
            in_specs=[
                pl.BlockSpec((B_BLK, TM, D), lambda b, m: (b, m, 0)),        # query
                pl.BlockSpec((B_BLK, L_q_pad, D), lambda b, m: (b, 0, 0)),   # context
                pl.BlockSpec((1, L_q_pad), lambda b, m: (0, 0)),             # key-mask bias
                pl.BlockSpec((D, D), lambda b, m: (0, 0)),                   # W_in.T
                pl.BlockSpec((D, D), lambda b, m: (0, 0)),                   # W_out.T (mix)
                pl.BlockSpec((D, D), lambda b, m: (0, 0)),                   # W_out.T (qp)
            ],
            out_specs=out_specs,
        ),
        compiler_params=pltpu.CompilerParams(
            dimension_semantics=("parallel", "parallel"),
            vmem_limit_bytes=vmem_limit_bytes),
    )(q, c, bias, w_in_t, w_out_mix_t, w_out_qp_t)

    out = results[0][:B, :L_out, :]
    if not return_attention:
        return out, None
    attn = results[1][:B, :L_out, :L_q]
    return out, attn


def attention_reference(query, context, w_in, w_out):
    """Pure-f32 JAX reference mirroring the PyTorch forward exactly."""
    qp = jnp.einsum("bld,ed->ble", query, w_in)             # linear_in (x @ W.T)
    scores = jnp.einsum("bld,bqd->blq", qp, context)
    attn = jax.nn.softmax(scores, axis=-1)
    mix = jnp.einsum("blq,bqd->bld", attn, context)
    combined = jnp.concatenate([mix, qp], axis=-1)          # (B, L_out, 2D)
    out = jnp.tanh(jnp.einsum("blc,dc->bld", combined, w_out))
    return out, attn


def attention_reference_bf16(query, context, w_in, w_out):
    """Reference that mirrors the kernel's bf16-input / f32-accumulate precision."""
    bf = jnp.bfloat16
    D = query.shape[-1]
    q = query.astype(bf)
    c = context.astype(bf)
    w_in_t = jnp.asarray(w_in).astype(bf).T
    w_out_t = jnp.asarray(w_out).T
    w1 = w_out_t[:D, :].astype(bf)
    w2 = w_out_t[D:, :].astype(bf)
    qp = jnp.einsum("bld,de->ble", q, w_in_t, preferred_element_type=jnp.float32)
    scores = jnp.einsum("bld,bqd->blq", qp.astype(bf), c,
                        preferred_element_type=jnp.float32)
    attn = jax.nn.softmax(scores, axis=-1)
    mix = jnp.einsum("blq,bqd->bld", attn.astype(bf), c,
                     preferred_element_type=jnp.float32)
    out = jnp.tanh(
        jnp.einsum("bld,de->ble", mix.astype(bf), w1, preferred_element_type=jnp.float32)
        + jnp.einsum("bld,de->ble", qp.astype(bf), w2, preferred_element_type=jnp.float32))
    return out, attn


if __name__ == "__main__":
    key = jax.random.PRNGKey(0)
    B, L_out, L_q, D = 2, 8, 16, 32

    k1, k2, k3, k4 = jax.random.split(key, 4)
    query = jax.random.normal(k1, (B, L_out, D), dtype=jnp.float32)
    context = jax.random.normal(k2, (B, L_q, D), dtype=jnp.float32)
    # nn.Linear weight shapes: [out_features, in_features]
    w_in = jax.random.normal(k3, (D, D), dtype=jnp.float32) * (1.0 / jnp.sqrt(D))
    w_out = jax.random.normal(k4, (D, 2 * D), dtype=jnp.float32) * (1.0 / jnp.sqrt(2 * D))

    out, attn = attention_general(query, context, w_in, w_out)
    out = jax.block_until_ready(out)
    attn = jax.block_until_ready(attn)

    assert out.shape == (B, L_out, D)
    assert attn.shape == (B, L_out, L_q)

    # Exact softmax in-kernel -> attention rows sum to 1.
    assert jnp.allclose(jnp.sum(attn, axis=-1), 1.0, atol=1e-4)

    # Check against a reference that matches the kernel's bf16/f32-accumulate precision.
    ref_out_bf, ref_attn_bf = attention_reference_bf16(query, context, w_in, w_out)
    assert jnp.allclose(out, ref_out_bf, atol=2e-2, rtol=2e-2)
    assert jnp.allclose(attn, ref_attn_bf, atol=2e-2, rtol=2e-2)

    # Sanity check against the exact f32 PyTorch-mirroring reference (bf16-level tolerance).
    ref_out, ref_attn = attention_reference(query, context, w_in, w_out)
    assert jnp.allclose(attn, ref_attn, atol=1e-1, rtol=1e-1)
    assert jnp.allclose(out, ref_out, atol=2e-1, rtol=2e-1)

    # Exercise the bandwidth-optimized path: no attention-weights writeback, bf16 output.
    out_fast, attn_none = attention_general(query, context, w_in, w_out,
                                            return_attention=False,
                                            out_dtype=jnp.bfloat16)
    out_fast = jax.block_until_ready(out_fast)
    assert attn_none is None
    assert jnp.allclose(out_fast.astype(jnp.float32), out, atol=1e-2, rtol=1e-2)

    print("KERNEL_OK")
</pallas_src>

<mosaic_0001>
module attributes {stable_mosaic.version = 11 : i64} {
  func.func @_attention_kernel(%arg0: i32, %arg1: i32, %arg2: memref<1x8x32xbf16, #tpu.memory_space<vmem>>, %arg3: memref<1x128x32xbf16, #tpu.memory_space<vmem>>, %arg4: memref<1x128xf32, #tpu.memory_space<vmem>>, %arg5: memref<32x32xbf16, #tpu.memory_space<vmem>>, %arg6: memref<32x32xbf16, #tpu.memory_space<vmem>>, %arg7: memref<32x32xbf16, #tpu.memory_space<vmem>>, %arg8: memref<1x8x32xf32, #tpu.memory_space<vmem>>, %arg9: memref<1x8x128xf32, #tpu.memory_space<vmem>>) attributes {dimension_semantics = [#tpu.dimension_semantics<parallel>, #tpu.dimension_semantics<parallel>], iteration_bounds = array<i64: 2, 1>, scalar_prefetch = 0 : i64, scratch_operands = 0 : i64, tpu.core_type = #tpu.core_type<tc>, window_params = [{transform_indices = @transform_0, window_bounds = array<i64: 1, 8, 32>}, {transform_indices = @transform_1, window_bounds = array<i64: 1, 128, 32>}, {pipeline_mode = #tpu.pipeline_mode<synchronous>, transform_indices = @transform_2, window_bounds = array<i64: 1, 128>}, {pipeline_mode = #tpu.pipeline_mode<synchronous>, transform_indices = @transform_3, window_bounds = array<i64: 32, 32>}, {pipeline_mode = #tpu.pipeline_mode<synchronous>, transform_indices = @transform_4, window_bounds = array<i64: 32, 32>}, {pipeline_mode = #tpu.pipeline_mode<synchronous>, transform_indices = @transform_5, window_bounds = array<i64: 32, 32>}, {transform_indices = @transform_6, window_bounds = array<i64: 1, 8, 32>}, {transform_indices = @transform_7, window_bounds = array<i64: 1, 8, 128>}]} {
    %c0 = arith.constant 0 : index
    %c0_0 = arith.constant 0 : index
    %c0_1 = arith.constant 0 : index
    %0 = vector.load %arg2[%c0, %c0_0, %c0_1] : memref<1x8x32xbf16, #tpu.memory_space<vmem>>, vector<1x8x32xbf16>
    %1 = vector.shape_cast %0 : vector<1x8x32xbf16> to vector<8x32xbf16>
    %c0_2 = arith.constant 0 : index
    %c0_3 = arith.constant 0 : index
    %2 = vector.load %arg5[%c0_2, %c0_3] : memref<32x32xbf16, #tpu.memory_space<vmem>>, vector<32x32xbf16>
    %cst = arith.constant dense<0.000000e+00> : vector<8x32xf32>
    %3 = tpu.matmul %1, %2, %cst {dimension_numbers = #tpu.dot_dimension_numbers<[1], [0], [0], [1], [0, 0, 1, 1], [], []>} : vector<8x32xbf16>, vector<32x32xbf16>, vector<8x32xf32> -> vector<8x32xf32>
    %4 = arith.truncf %3 : vector<8x32xf32> to vector<8x32xbf16>
    %5 = vector.shape_cast %4 : vector<8x32xbf16> to vector<1x8x32xbf16>
    %c0_4 = arith.constant 0 : index
    %c0_5 = arith.constant 0 : index
    %c0_6 = arith.constant 0 : index
    %6 = vector.load %arg3[%c0_4, %c0_5, %c0_6] : memref<1x128x32xbf16, #tpu.memory_space<vmem>>, vector<1x128x32xbf16>
    "tpu.trace_start"() <{level = 10 : i32, message = "bld,bqd->blq"}> : () -> ()
    %cst_7 = arith.constant dense<0.000000e+00> : vector<1x8x128xf32>
    %7 = tpu.matmul %5, %6, %cst_7 {dimension_numbers = #tpu.dot_dimension_numbers<[2], [2], [1], [1], [0, 0, 0, 1, 1, 1], [0], [0]>} : vector<1x8x32xbf16>, vector<1x128x32xbf16>, vector<1x8x128xf32> -> vector<1x8x128xf32>
    "tpu.trace_stop"() : () -> ()
    %c0_8 = arith.constant 0 : index
    %c0_9 = arith.constant 0 : index
    %8 = vector.load %arg4[%c0_8, %c0_9] : memref<1x128xf32, #tpu.memory_space<vmem>>, vector<1x128xf32>
    %9 = vector.shape_cast %8 : vector<1x128xf32> to vector<1x1x128xf32>
    %10 = vector.broadcast %9 : vector<1x1x128xf32> to vector<1x8x128xf32>
    %11 = arith.addf %7, %10 : vector<1x8x128xf32>
    %cst_10 = arith.constant dense<0xFF800000> : vector<1x8xf32>
    %12 = vector.multi_reduction <maximumf>, %11, %cst_10 [2] : vector<1x8x128xf32> to vector<1x8xf32>
    %13 = vector.shape_cast %12 : vector<1x8xf32> to vector<1x8x1xf32>
    %14 = vector.broadcast %13 : vector<1x8x1xf32> to vector<1x8x128xf32>
    %15 = arith.subf %11, %14 : vector<1x8x128xf32>
    %16 = math.exp %15 : vector<1x8x128xf32>
    %cst_11 = arith.constant dense<0.000000e+00> : vector<1x8xf32>
    %17 = vector.multi_reduction <add>, %16, %cst_11 [2] : vector<1x8x128xf32> to vector<1x8xf32>
    %18 = vector.shape_cast %17 : vector<1x8xf32> to vector<1x8x1xf32>
    %cst_12 = arith.constant 1.000000e+00 : f32
    %19 = vector.broadcast %cst_12 : f32 to vector<1x8x1xf32>
    %20 = arith.divf %19, %18 : vector<1x8x1xf32>
    %21 = vector.broadcast %20 : vector<1x8x1xf32> to vector<1x8x128xf32>
    %22 = arith.mulf %16, %21 : vector<1x8x128xf32>
    %23 = arith.truncf %22 : vector<1x8x128xf32> to vector<1x8x128xbf16>
    "tpu.trace_start"() <{level = 10 : i32, message = "blq,bqd->bld"}> : () -> ()
    %cst_13 = arith.constant dense<0.000000e+00> : vector<1x8x32xf32>
    %24 = tpu.matmul %23, %6, %cst_13 {dimension_numbers = #tpu.dot_dimension_numbers<[2], [1], [1], [2], [0, 0, 0, 1, 1, 2], [0], [0]>} : vector<1x8x128xbf16>, vector<1x128x32xbf16>, vector<1x8x32xf32> -> vector<1x8x32xf32>
    "tpu.trace_stop"() : () -> ()
    %25 = arith.truncf %24 : vector<1x8x32xf32> to vector<1x8x32xbf16>
    %26 = vector.shape_cast %25 : vector<1x8x32xbf16> to vector<8x32xbf16>
    %c0_14 = arith.constant 0 : index
    %c0_15 = arith.constant 0 : index
    %27 = vector.load %arg6[%c0_14, %c0_15] : memref<32x32xbf16, #tpu.memory_space<vmem>>, vector<32x32xbf16>
    %cst_16 = arith.constant dense<0.000000e+00> : vector<8x32xf32>
    %28 = tpu.matmul %26, %27, %cst_16 {dimension_numbers = #tpu.dot_dimension_numbers<[1], [0], [0], [1], [0, 0, 1, 1], [], []>} : vector<8x32xbf16>, vector<32x32xbf16>, vector<8x32xf32> -> vector<8x32xf32>
    %c0_17 = arith.constant 0 : index
    %c0_18 = arith.constant 0 : index
    %29 = vector.load %arg7[%c0_17, %c0_18] : memref<32x32xbf16, #tpu.memory_space<vmem>>, vector<32x32xbf16>
    %cst_19 = arith.constant dense<0.000000e+00> : vector<8x32xf32>
    %30 = tpu.matmul %4, %29, %cst_19 {dimension_numbers = #tpu.dot_dimension_numbers<[1], [0], [0], [1], [0, 0, 1, 1], [], []>} : vector<8x32xbf16>, vector<32x32xbf16>, vector<8x32xf32> -> vector<8x32xf32>
    %31 = arith.addf %28, %30 : vector<8x32xf32>
    %32 = math.tanh %31 : vector<8x32xf32>
    %c0_20 = arith.constant 0 : index
    %c0_21 = arith.constant 0 : index
    %c0_22 = arith.constant 0 : index
    %33 = vector.load %arg8[%c0_20, %c0_21, %c0_22] : memref<1x8x32xf32, #tpu.memory_space<vmem>>, vector<1x8x32xf32>
    %34 = vector.shape_cast %33 : vector<1x8x32xf32> to vector<8x32xf32>
    %35 = vector.shape_cast %32 : vector<8x32xf32> to vector<1x8x32xf32>
    tpu.vector_store %arg8[%c0_20, %c0_21, %c0_22], %35 {strides = array<i32>} : memref<1x8x32xf32, #tpu.memory_space<vmem>>, vector<1x8x32xf32>,
    %c0_23 = arith.constant 0 : index
    %c0_24 = arith.constant 0 : index
    %c0_25 = arith.constant 0 : index
    %36 = vector.load %arg9[%c0_23, %c0_24, %c0_25] : memref<1x8x128xf32, #tpu.memory_space<vmem>>, vector<1x8x128xf32>
    tpu.vector_store %arg9[%c0_23, %c0_24, %c0_25], %22 {strides = array<i32>} : memref<1x8x128xf32, #tpu.memory_space<vmem>>, vector<1x8x128xf32>,
    return
  }
  func.func @transform_0(%arg0: i32, %arg1: i32) -> (i32, i32, i32) {
    %c0_i32 = arith.constant 0 : i32
    %c0_i32_0 = arith.constant 0 : i32
    return %arg0, %arg1, %c0_i32 : i32, i32, i32
  }
  func.func @transform_1(%arg0: i32, %arg1: i32) -> (i32, i32, i32) {
    %c0_i32 = arith.constant 0 : i32
    %c0_i32_0 = arith.constant 0 : i32
    %c0_i32_1 = arith.constant 0 : i32
    return %arg0, %c0_i32, %c0_i32_0 : i32, i32, i32
  }
  func.func @transform_2(%arg0: i32, %arg1: i32) -> (i32, i32) {
    %c0_i32 = arith.constant 0 : i32
    %c0_i32_0 = arith.constant 0 : i32
    %c0_i32_1 = arith.constant 0 : i32
    return %c0_i32, %c0_i32_0 : i32, i32
  }
  func.func @transform_3(%arg0: i32, %arg1: i32) -> (i32, i32) {
    %c0_i32 = arith.constant 0 : i32
    %c0_i32_0 = arith.constant 0 : i32
    %c0_i32_1 = arith.constant 0 : i32
    return %c0_i32, %c0_i32_0 : i32, i32
  }
  func.func @transform_4(%arg0: i32, %arg1: i32) -> (i32, i32) {
    %c0_i32 = arith.constant 0 : i32
    %c0_i32_0 = arith.constant 0 : i32
    %c0_i32_1 = arith.constant 0 : i32
    return %c0_i32, %c0_i32_0 : i32, i32
  }
  func.func @transform_5(%arg0: i32, %arg1: i32) -> (i32, i32) {
    %c0_i32 = arith.constant 0 : i32
    %c0_i32_0 = arith.constant 0 : i32
    %c0_i32_1 = arith.constant 0 : i32
    return %c0_i32, %c0_i32_0 : i32, i32
  }
  func.func @transform_6(%arg0: i32, %arg1: i32) -> (i32, i32, i32) {
    %c0_i32 = arith.constant 0 : i32
    %c0_i32_0 = arith.constant 0 : i32
    return %arg0, %arg1, %c0_i32 : i32, i32, i32
  }
  func.func @transform_7(%arg0: i32, %arg1: i32) -> (i32, i32, i32) {
    %c0_i32 = arith.constant 0 : i32
    %c0_i32_0 = arith.constant 0 : i32
    return %arg0, %arg1, %c0_i32 : i32, i32, i32
  }
}

</mosaic_0001>

<llo_original>
// kernel: tpu_custom_call.1
$region0: #{tpu_custom_call.1}
  #allocation0 [shape = 'u32[]', space=smem, size = 0x4, offset = 0x4, fixed_abs, tag = 'smem constant byte address 0x4 - core index']
  #allocation1 [shape = 'u32[144,128]{1,0:T(1,128)}', space=vmem, size = 0x12000, scoped, tag = 'internal scratch']
  %s0 = inlined_call_operand.vmem [shape: bf16[2,8,32], index: 0, kind: input, shape index: {}]
  %s1 = inlined_call_operand.vmem [shape: bf16[2,128,32], index: 1, kind: input, shape index: {}]
  %s2 = inlined_call_operand.vmem [shape: f32[1,128], index: 2, kind: input, shape index: {}]
  %s3 = inlined_call_operand.vmem [shape: bf16[32,32], index: 3, kind: input, shape index: {}]
  %s4 = inlined_call_operand.vmem [shape: bf16[32,32], index: 4, kind: input, shape index: {}]
  %s5 = inlined_call_operand.vmem [shape: bf16[32,32], index: 5, kind: input, shape index: {}]
  %s6 = inlined_call_operand.hbm [shape: f32[2,8,32], index: 6, kind: output, shape index: {0}]
  %s7 = inlined_call_operand.hbm [shape: f32[2,8,128], index: 7, kind: output, shape index: {1}]
  %8 = xla_tuple %s6, %s7
  %s9 = sld [smem:[#allocation0]]
  $region65: #{tpu_custom_call.1} parent=0
    _
  %s11 = ssub.s32 1, %s9
  %s12 = scalar_select 0, %s11, %s9
  $region1: #{tpu_custom_call.1} parent=0
    #allocation2 [shape = 'u8[8192]{0}', space=vmem, size = 0x2000, scoped, tag = 'output window, operand 0']
    #allocation3 [shape = 's32[2]{0}', space=sflag, size = 0x8, scoped, tag = 'scoped memory for tpu_custom_call.1']
    #allocation4 [shape = 'u8[8192]{0}', space=vmem, size = 0x2000, scoped, tag = 'output window, operand 1']
    #allocation5 [shape = 's32[2]{0}', space=sflag, size = 0x8, scoped, tag = 'scoped memory for tpu_custom_call.1']
    %13 = vsyncpa [#allocation3], 0
    %s14 = scalar_lea.sflag [#allocation3], 1
    %15 = vsyncpa %s14, 0
    %16 = vsyncpa [#allocation5], 0
    %s17 = scalar_lea.sflag [#allocation5], 1
    %18 = vsyncpa %s17, 0
    loop: start=0, step=1, limit=4
    $region2: #{tpu_custom_call.1} parent=1 // loop_pre_header
      _
    $region3: #{tpu_custom_call.1} parent=1 // loop_header
      %s20 = sphi 0, %s24
      %p21 = scmp.ge.s32.totalorder %s20, 4
      %s27 = sphi 0, %s39
      %s28 = sphi 0, %s35
      %s29 = sphi 0, %s27
      %s30 = sphi 0, %s28
      %s31 = sphi 0, %s29
      %s32 = sphi 0, %s30
      %s44 = sphi 0, %s46
      %s47 = sphi 0, %s44
      %s48 = sphi 0, %s47
      %s64 = sphi 0, %s48
      %s70 = sphi 0, %s72
      %s73 = sphi 0, %s70
      %s74 = sphi 0, %s73
      %s90 = sphi 0, %s74
      %s94 = sphi 0, %s94
      %s96 = sphi 0, %s94
      %s97 = sphi 0, %s96
      %s111 = sphi 0, %s97
      %s115 = sphi 0, %s115
      %s117 = sphi 0, %s115
      %s118 = sphi 0, %s117
      %s132 = sphi 0, %s118
      %s136 = sphi 0, %s136
      %s138 = sphi 0, %s136
      %s139 = sphi 0, %s138
      %s153 = sphi 0, %s139
      %s157 = sphi 0, %s157
      %s159 = sphi 0, %s157
      %s160 = sphi 0, %s159
      %s174 = sphi 0, %s160
      %s182 = sphi 0, %s184
      %s185 = sphi 0, %s182
      %s186 = sphi 0, %s185
      %s202 = sphi 0, %s186
      %s210 = sphi 0, %s212
      %s213 = sphi 0, %s210
      %s214 = sphi 0, %s213
      %s230 = sphi 0, %s214
    $region4: #{tpu_custom_call.1} parent=1 // loop_header_branch
      %23 = sbr.rel (%p21) target = $region8
    $region5: #{tpu_custom_call.1} parent=1 // loop_body
      %s25 = ssub.s32 %s20, 1
      %s26 = ssub.s32 %s20, 2
      %s33 = sadd.s32 1, %s28
      %p34 = scmp.ge.s32.totalorder %s33, 1
      %s35 = scalar_select %p34, 0, %s33
      %s36 = sadd.s32 1, %s27
      %s37 = scalar_select %p34, %s36, %s27
      %p38 = scmp.ge.s32.totalorder %s37, 2
      %s39 = scalar_select %p38, 0, %s37
      %s40 = ssub.s32 %s27, %s39
      %s41 = ssub.s32 %s28, %s35
      %s42 = sor.u32 %s40, %s41
      %p43 = scmp.eq.s32.totalorder %s42, 0
      %s45 = sadd.s32 %s44, 1
      %s46 = scalar_select %p43, %s44, %s45
      %p49 = pneg %p43
      %p50 = scmp.eq.s32.totalorder %s20, 1
      %p51 = por %p49, %p50
      %p52 = scmp.ne.s32.totalorder %s44, %s47
      %p53 = scmp.eq.s32.totalorder %s20, 0
      %p54 = por %p52, %p53
      %p55 = scmp.ne.s32.totalorder %s44, %s47
      %p56 = scmp.eq.s32.totalorder %s25, 1
      %p57 = por %p55, %p56
      %p58 = scmp.ne.s32.totalorder %s47, %s48
      %p59 = scmp.eq.s32.totalorder %s25, 0
      %p60 = por %p58, %p59
      %p61 = scmp.ne.s32.totalorder %s47, %s48
      %p62 = scmp.eq.s32.totalorder %s26, 1
      %p63 = por %p61, %p62
      %p65 = scmp.ne.s32.totalorder %s48, %s64
      %p66 = scmp.eq.s32.totalorder %s26, 0
      %p67 = por %p65, %p66
      %s68 = ssub.s32 %s27, %s39
      %p69 = scmp.eq.s32.totalorder %s68, 0
      %s71 = sadd.s32 %s70, 1
      %s72 = scalar_select %p69, %s70, %s71
      %p75 = pneg %p69
      %p76 = scmp.eq.s32.totalorder %s20, 1
      %p77 = por %p75, %p76
      %p78 = scmp.ne.s32.totalorder %s70, %s73
      %p79 = scmp.eq.s32.totalorder %s20, 0
      %p80 = por %p78, %p79
      %p81 = scmp.ne.s32.totalorder %s70, %s73
      %p82 = scmp.eq.s32.totalorder %s25, 1
      %p83 = por %p81, %p82
      %p84 = scmp.ne.s32.totalorder %s73, %s74
      %p85 = scmp.eq.s32.totalorder %s25, 0
      %p86 = por %p84, %p85
      %p87 = scmp.ne.s32.totalorder %s73, %s74
      %p88 = scmp.eq.s32.totalorder %s26, 1
      %p89 = por %p87, %p88
      %p91 = scmp.ne.s32.totalorder %s74, %s90
      %p92 = scmp.eq.s32.totalorder %s26, 0
      %p93 = por %p91, %p92
      %s95 = sadd.s32 %s94, 1
      %p98 = scmp.eq.s32.totalorder %s20, 1
      %p99 = scmp.ne.s32.totalorder %s94, %s96
      %p100 = scmp.eq.s32.totalorder %s20, 0
      %p101 = por %p99, %p100
      %p102 = scmp.ne.s32.totalorder %s94, %s96
      %p103 = scmp.eq.s32.totalorder %s25, 1
      %p104 = por %p102, %p103
      %p105 = scmp.ne.s32.totalorder %s96, %s97
      %p106 = scmp.eq.s32.totalorder %s25, 0
      %p107 = por %p105, %p106
      %p108 = scmp.ne.s32.totalorder %s96, %s97
      %p109 = scmp.eq.s32.totalorder %s26, 1
      %p110 = por %p108, %p109
      %p112 = scmp.ne.s32.totalorder %s97, %s111
      %p113 = scmp.eq.s32.totalorder %s26, 0
      %p114 = por %p112, %p113
      %s116 = sadd.s32 %s115, 1
      %p119 = scmp.eq.s32.totalorder %s20, 1
      %p120 = scmp.ne.s32.totalorder %s115, %s117
      %p121 = scmp.eq.s32.totalorder %s20, 0
      %p122 = por %p120, %p121
      %p123 = scmp.ne.s32.totalorder %s115, %s117
      %p124 = scmp.eq.s32.totalorder %s25, 1
      %p125 = por %p123, %p124
      %p126 = scmp.ne.s32.totalorder %s117, %s118
      %p127 = scmp.eq.s32.totalorder %s25, 0
      %p128 = por %p126, %p127
      %p129 = scmp.ne.s32.totalorder %s117, %s118
      %p130 = scmp.eq.s32.totalorder %s26, 1
      %p131 = por %p129, %p130
      %p133 = scmp.ne.s32.totalorder %s118, %s132
      %p134 = scmp.eq.s32.totalorder %s26, 0
      %p135 = por %p133, %p134
      %s137 = sadd.s32 %s136, 1
      %p140 = scmp.eq.s32.totalorder %s20, 1
      %p141 = scmp.ne.s32.totalorder %s136, %s138
      %p142 = scmp.eq.s32.totalorder %s20, 0
      %p143 = por %p141, %p142
      %p144 = scmp.ne.s32.totalorder %s136, %s138
      %p145 = scmp.eq.s32.totalorder %s25, 1
      %p146 = por %p144, %p145
      %p147 = scmp.ne.s32.totalorder %s138, %s139
      %p148 = scmp.eq.s32.totalorder %s25, 0
      %p149 = por %p147, %p148
      %p150 = scmp.ne.s32.totalorder %s138, %s139
      %p151 = scmp.eq.s32.totalorder %s26, 1
      %p152 = por %p150, %p151
      %p154 = scmp.ne.s32.totalorder %s139, %s153
      %p155 = scmp.eq.s32.totalorder %s26, 0
      %p156 = por %p154, %p155
      %s158 = sadd.s32 %s157, 1
      %p161 = scmp.eq.s32.totalorder %s20, 1
      %p162 = scmp.ne.s32.totalorder %s157, %s159
      %p163 = scmp.eq.s32.totalorder %s20, 0
      %p164 = por %p162, %p163
      %p165 = scmp.ne.s32.totalorder %s157, %s159
      %p166 = scmp.eq.s32.totalorder %s25, 1
      %p167 = por %p165, %p166
      %p168 = scmp.ne.s32.totalorder %s159, %s160
      %p169 = scmp.eq.s32.totalorder %s25, 0
      %p170 = por %p168, %p169
      %p171 = scmp.ne.s32.totalorder %s159, %s160
      %p172 = scmp.eq.s32.totalorder %s26, 1
      %p173 = por %p171, %p172
      %p175 = scmp.ne.s32.totalorder %s160, %s174
      %p176 = scmp.eq.s32.totalorder %s26, 0
      %p177 = por %p175, %p176
      %s178 = ssub.s32 %s27, %s39
      %s179 = ssub.s32 %s28, %s35
      %s180 = sor.u32 %s178, %s179
      %p181 = scmp.eq.s32.totalorder %s180, 0
      %s183 = sadd.s32 %s182, 1
      %s184 = scalar_select %p181, %s182, %s183
      %p187 = pneg %p181
      %p188 = scmp.eq.s32.totalorder %s20, 1
      %p189 = por %p187, %p188
      %p190 = scmp.ne.s32.totalorder %s182, %s185
      %p191 = scmp.eq.s32.totalorder %s20, 0
      %p192 = por %p190, %p191
      %p193 = scmp.ne.s32.totalorder %s182, %s185
      %p194 = scmp.eq.s32.totalorder %s25, 1
      %p195 = por %p193, %p194
      %p196 = scmp.ne.s32.totalorder %s185, %s186
      %p197 = scmp.eq.s32.totalorder %s25, 0
      %p198 = por %p196, %p197
      %p199 = scmp.ne.s32.totalorder %s185, %s186
      %p200 = scmp.eq.s32.totalorder %s26, 1
      %p201 = por %p199, %p200
      %p203 = scmp.ne.s32.totalorder %s186, %s202
      %p204 = scmp.eq.s32.totalorder %s26, 0
      %p205 = por %p203, %p204
      %s206 = ssub.s32 %s27, %s39
      %s207 = ssub.s32 %s28, %s35
      %s208 = sor.u32 %s206, %s207
      %p209 = scmp.eq.s32.totalorder %s208, 0
      %s211 = sadd.s32 %s210, 1
      %s212 = scalar_select %p209, %s210, %s211
      %p215 = pneg %p209
      %p216 = scmp.eq.s32.totalorder %s20, 1
      %p217 = por %p215, %p216
      %p218 = scmp.ne.s32.totalorder %s210, %s213
      %p219 = scmp.eq.s32.totalorder %s20, 0
      %p220 = por %p218, %p219
      %p221 = scmp.ne.s32.totalorder %s210, %s213
      %p222 = scmp.eq.s32.totalorder %s25, 1
      %p223 = por %p221, %p222
      %p224 = scmp.ne.s32.totalorder %s213, %s214
      %p225 = scmp.eq.s32.totalorder %s25, 0
      %p226 = por %p224, %p225
      %p227 = scmp.ne.s32.totalorder %s213, %s214
      %p228 = scmp.eq.s32.totalorder %s26, 1
      %p229 = por %p227, %p228
      %p231 = scmp.ne.s32.totalorder %s214, %s230
      %p232 = scmp.eq.s32.totalorder %s26, 0
      %p233 = por %p231, %p232
      %p234 = scmp.le.s32.totalorder 1, %s20
      %p235 = scmp.lt.s32.totalorder %s20, 3
      %p236 = pnand %p234, %p235
      %p237 = pneg %p236
      // Predicated region
      $region9: #{tpu_custom_call.1} parent=5 // pred_check
        _
      $region10: #{tpu_custom_call.1} parent=5 // pred_check_branch
        %239 = sbr.rel (%p236) target = $region12
      $region11: #{tpu_custom_call.1} parent=5 // pred_region
        %s240 = ssub.s32 %s20, 1
        // Predicated region
        $region13: #{tpu_custom_call.1} parent=11 // pred_check
          %p241 = pneg %p107
        $region14: #{tpu_custom_call.1} parent=11 // pred_check_branch
          %243 = sbr.rel (%p241) target = $region16
        $region15: #{tpu_custom_call.1} parent=11 // pred_region
          _
        $region16: #{tpu_custom_call.1} parent=11 // pred_fallthru
          _
        // Predicated region
        $region17: #{tpu_custom_call.1} parent=11 // pred_check
          %p244 = pneg %p128
        $region18: #{tpu_custom_call.1} parent=11 // pred_check_branch
          %246 = sbr.rel (%p244) target = $region20
        $region19: #{tpu_custom_call.1} parent=11 // pred_region
          _
        $region20: #{tpu_custom_call.1} parent=11 // pred_fallthru
          _
        // Predicated region
        $region21: #{tpu_custom_call.1} parent=11 // pred_check
          %p247 = pneg %p149
        $region22: #{tpu_custom_call.1} parent=11 // pred_check_branch
          %249 = sbr.rel (%p247) target = $region24
        $region23: #{tpu_custom_call.1} parent=11 // pred_region
          _
        $region24: #{tpu_custom_call.1} parent=11 // pred_fallthru
          _
        // Predicated region
        $region25: #{tpu_custom_call.1} parent=11 // pred_check
          %p250 = pneg %p170
        $region26: #{tpu_custom_call.1} parent=11 // pred_check_branch
          %252 = sbr.rel (%p250) target = $region28
        $region27: #{tpu_custom_call.1} parent=11 // pred_region
          _
        $region28: #{tpu_custom_call.1} parent=11 // pred_fallthru
          _
      $region12: #{tpu_custom_call.1} parent=5 // pred_fallthru
        _
      %p253 = scmp.lt.s32.totalorder %s20, 2
      // Predicated region
      $region29: #{tpu_custom_call.1} parent=5 // pred_check
        %p254 = pneg %p253
      $region30: #{tpu_custom_call.1} parent=5 // pred_check_branch
        %256 = sbr.rel (%p254) target = $region32
      $region31: #{tpu_custom_call.1} parent=5 // pred_region
        // Predicated region
        $region33: #{tpu_custom_call.1} parent=31 // pred_check
          %p257 = pneg %p54
        $region34: #{tpu_custom_call.1} parent=31 // pred_check_branch
          %259 = sbr.rel (%p257) target = $region36
        $region35: #{tpu_custom_call.1} parent=31 // pred_region
          %p260 = scmp.lt.s32.totalorder %s27, 1
          %s261 = scalar_select %p260, %s27, 1
          %p262 = scmp.lt.s32.totalorder %s28, 0
          %s263 = scalar_select %p262, %s28, 0
          %s264 = sadd.s32 %s263, %s261
          %s265 = smul.addr %s264, 4
          %s266 = scalar_lea.vmem %s0, %s265
        $region36: #{tpu_custom_call.1} parent=31 // pred_fallthru
          _
        // Predicated region
        $region37: #{tpu_custom_call.1} parent=31 // pred_check
          %p267 = pneg %p80
        $region38: #{tpu_custom_call.1} parent=31 // pred_check_branch
          %269 = sbr.rel (%p267) target = $region40
        $region39: #{tpu_custom_call.1} parent=31 // pred_region
          %p270 = scmp.lt.s32.totalorder %s27, 1
          %s271 = scalar_select %p270, %s27, 1
          %s272 = smul.addr %s271, 16
          %s273 = smul.addr %s272, 4
          %s274 = scalar_lea.vmem %s1, %s273
        $region40: #{tpu_custom_call.1} parent=31 // pred_fallthru
          _
      $region32: #{tpu_custom_call.1} parent=5 // pred_fallthru
        _
      %p275 = scmp.le.s32.totalorder 1, %s20
      %p276 = scmp.lt.s32.totalorder %s20, 3
      %p277 = pnand %p275, %p276
      %p278 = pneg %p277
      // Predicated region
      $region41: #{tpu_custom_call.1} parent=5 // pred_check
        _
      $region42: #{tpu_custom_call.1} parent=5 // pred_check_branch
        %280 = sbr.rel (%p277) target = $region44
      $region43: #{tpu_custom_call.1} parent=5 // pred_region
        %s281 = ssub.s32 %s20, 1
        %p282 = scmp.lt.s32.totalorder %s29, 1
        %s283 = scalar_select %p282, %s29, 1
        %p284 = scmp.lt.s32.totalorder %s30, 0
        %s285 = scalar_select %p284, %s30, 0
        %s286 = sadd.s32 %s285, %s283
        %s287 = smul.addr %s286, 4
        %s288 = scalar_lea.vmem %s0, %s287
        %p289 = pneg %p60
        %p290 = pneg %p57
        %p291 = scmp.lt.s32.totalorder %s29, 1
        %s292 = scalar_select %p291, %s29, 1
        %s293 = smul.addr %s292, 16
        %s294 = smul.addr %s293, 4
        %s295 = scalar_lea.vmem %s1, %s294
        %p296 = pneg %p86
        %p297 = pneg %p83
        %p298 = pneg %p107
        %p299 = pneg %p104
        %p300 = pneg %p128
        %p301 = pneg %p125
        %p302 = pneg %p149
        %p303 = pneg %p146
        %p304 = pneg %p170
        %p305 = pneg %p167
        %p306 = pneg %p198
        %p307 = pneg %p195
        %s308 = sand.u32 %s185, 1
        %s309 = scalar_lea.sflag [#allocation3], %s308
        %s310 = sand.u32 %s185, 1
        %s311 = smul.addr %s310, 8
        %s312 = scalar_lea.vmem [#allocation2], %s311
        %p313 = pneg %p226
        %p314 = pneg %p223
        %s315 = sand.u32 %s213, 1
        %s316 = scalar_lea.sflag [#allocation5], %s315
        %s317 = sand.u32 %s213, 1
        %s318 = smul.addr %s317, 8
        %s319 = scalar_lea.vmem [#allocation4], %s318
        %p320 = scmp.lt.s32.totalorder %s29, 1
        %s321 = scalar_select %p320, %s29, 1
        %p322 = scmp.lt.s32.totalorder %s30, 0
        %s323 = scalar_select %p322, %s30, 0
        %s324 = sadd.s32 %s323, %s321
        %s325 = smul.addr %s324, 4
        %s326 = scalar_lea.vmem %s0, %s325
        %p327 = scmp.lt.s32.totalorder %s29, 1
        %s328 = scalar_select %p327, %s29, 1
        %s329 = smul.addr %s328, 16
        %s330 = smul.addr %s329, 4
        %s331 = scalar_lea.vmem %s1, %s330
        %v333 = vld [vmem:[%s326] sm:$0xf]
        %v334 = vld [vmem:[%s3] sm:$0xf]
        %v335 = vld [vmem:[%s3 + $0x4] sm:$0xf]
        %v336 = vld [vmem:[%s3 + $0x8] sm:$0xf]
        %v337 = vld [vmem:[%s3 + $0xc] sm:$0xf]
        %v342 = vunpack.c.l.b16 %v334
        %v343 = vunpack.c.l.b16 %v335
        %v344 = vunpack.c.l.b16 %v336
        %v345 = vunpack.c.l.b16 %v337
        %v346 = vpack.c.b16 %v343, %v342
        %v347 = vpack.c.b16 %v345, %v344
        %vm350 = vcmask 261120
        %v352 = vsel %vm350, %v333, 0
        %354 = vmatprep.subr.bf16.mxu0 0
        %355 = vmatpush1.bf16.msra.mxu0 %v346
        %356 = vmatprep.subr.bf16.mxu0 0
        %357 = vmatpush1.bf16.msra.mxu0 %v347
        %358 = vmatprep.subr.bf16.mxu0 0
        %359 = vmatpush1.bf16.msra.mxu0 0
        %360 = vmatprep.subr.bf16.mxu0 0
        %361 = vmatpush1.bf16.msra.mxu0 0
        %362 = vmatprep.subr.bf16.mxu0 0
        %363 = vmatpush1.bf16.msra.mxu0 0
        %364 = vmatprep.subr.bf16.mxu0 0
        %365 = vmatpush1.bf16.msra.mxu0 0
        %366 = vmatprep.subr.bf16.mxu0 0
        %367 = vmatpush1.bf16.msra.mxu0 0
        %368 = vmatprep.subr.bf16.mxu0 0
        %369 = vmatpush1.bf16.msra.mxu0 0
        %370 = vmatprep.subr.bf16.mxu0 0
        %371 = vmatpush1.bf16.msra.mxu0 0
        %372 = vmatprep.subr.bf16.mxu0 0
        %373 = vmatpush1.bf16.msra.mxu0 0
        %374 = vmatprep.subr.bf16.mxu0 0
        %375 = vmatpush1.bf16.msra.mxu0 0
        %376 = vmatprep.subr.bf16.mxu0 0
        %377 = vmatpush1.bf16.msra.mxu0 0
        %378 = vmatprep.subr.bf16.mxu0 0
        %379 = vmatpush1.bf16.msra.mxu0 0
        %380 = vmatprep.subr.bf16.mxu0 0
        %381 = vmatpush1.bf16.msra.mxu0 0
        %382 = vmatprep.subr.bf16.mxu0 0
        %383 = vmatpush1.bf16.msra.mxu0 0
        %384 = vmatprep.subr.bf16.mxu0 0
        %385 = vmatpush1.bf16.msra.mxu0 0
        %386 = vmatprep.mubr.bf16.mxu0 0
        %387 = vmatmul.mubr.bf16.gmra.mrb[0].mxu0 %v352
        %v388 = vpop.f32.mrb[0].mxu0
        %v389 = vadd.f32 0.0, %v388
        %v390 = vpop.f32.mrb[0].mxu0
        %v391 = vpop.f32.mrb[0].mxu0
        %v392 = vpop.f32.mrb[0].mxu0
        %393 = vdwg.mxu0
        %v394 = vpack.c.bf16 %v389, %v389
        %v395 = vld [vmem:[%s331] sm:$0xf]
        %v396 = vld [vmem:[%s331 + $0x4] sm:$0xf]
        %v397 = vld [vmem:[%s331 + $0x8] sm:$0xf]
        %v398 = vld [vmem:[%s331 + $0xc] sm:$0xf]
        %v399 = vld [vmem:[%s331 + $0x10] sm:$0xf]
        %v400 = vld [vmem:[%s331 + $0x14] sm:$0xf]
        %v401 = vld [vmem:[%s331 + $0x18] sm:$0xf]
        %v402 = vld [vmem:[%s331 + $0x1c] sm:$0xf]
        %v403 = vld [vmem:[%s331 + $0x20] sm:$0xf]
        %v404 = vld [vmem:[%s331 + $0x24] sm:$0xf]
        %v405 = vld [vmem:[%s331 + $0x28] sm:$0xf]
        %v406 = vld [vmem:[%s331 + $0x2c] sm:$0xf]
        %v407 = vld [vmem:[%s331 + $0x30] sm:$0xf]
        %v408 = vld [vmem:[%s331 + $0x34] sm:$0xf]
        %v409 = vld [vmem:[%s331 + $0x38] sm:$0xf]
        %v410 = vld [vmem:[%s331 + $0x3c] sm:$0xf]
        %v411 = vld [vmem:[%s2] sm:$0x1]
        %v413 = vlaneseq
        %v414 = vshrl.u32 %v413, 7
        %v415 = vsub.s32 0, %v414
        %v416 = vrot.slane %v411, %v415
        %v434 = vunpack.c.l.b16 %v395
        %v435 = vunpack.c.l.b16 %v396
        %v436 = vunpack.c.l.b16 %v397
        %v437 = vunpack.c.l.b16 %v398
        %v438 = vunpack.c.l.b16 %v399
        %v439 = vunpack.c.l.b16 %v400
        %v440 = vunpack.c.l.b16 %v401
        %v441 = vunpack.c.l.b16 %v402
        %v442 = vunpack.c.l.b16 %v403
        %v443 = vunpack.c.l.b16 %v404
        %v444 = vunpack.c.l.b16 %v405
        %v445 = vunpack.c.l.b16 %v406
        %v446 = vunpack.c.l.b16 %v407
        %v447 = vunpack.c.l.b16 %v408
        %v448 = vunpack.c.l.b16 %v409
        %v449 = vunpack.c.l.b16 %v410
        %v450 = vpack.c.b16 %v435, %v434
        %v451 = vpack.c.b16 %v437, %v436
        %v452 = vpack.c.b16 %v439, %v438
        %v453 = vpack.c.b16 %v441, %v440
        %v454 = vpack.c.b16 %v443, %v442
        %v455 = vpack.c.b16 %v445, %v444
        %v456 = vpack.c.b16 %v447, %v446
        %v457 = vpack.c.b16 %v449, %v448
        %v459 = vsel %vm350, %v394, 0
        %v462 = vsel %vm350, %v450, 0
        %v465 = vsel %vm350, %v451, 0
        %v468 = vsel %vm350, %v452, 0
        %v471 = vsel %vm350, %v453, 0
        %v474 = vsel %vm350, %v454, 0
        %v477 = vsel %vm350, %v455, 0
        %v480 = vsel %vm350, %v456, 0
        %v483 = vsel %vm350, %v457, 0
        %485 = vmatprep.subr.bf16.mxu0 0
        %486 = vmatpush1.bf16.xpose.msra.mxu0 %v462
        %487 = vmatprep.subr.bf16.mxu0 0
        %488 = vmatpush1.bf16.xpose.msra.mxu0 %v465
        %489 = vmatprep.subr.bf16.mxu0 0
        %490 = vmatpush1.bf16.xpose.msra.mxu0 %v468
        %491 = vmatprep.subr.bf16.mxu0 0
        %492 = vmatpush1.bf16.xpose.msra.mxu0 %v471
        %493 = vmatprep.subr.bf16.mxu0 0
        %494 = vmatpush1.bf16.xpose.msra.mxu0 %v474
        %495 = vmatprep.subr.bf16.mxu0 0
        %496 = vmatpush1.bf16.xpose.msra.mxu0 %v477
        %497 = vmatprep.subr.bf16.mxu0 0
        %498 = vmatpush1.bf16.xpose.msra.mxu0 %v480
        %499 = vmatprep.subr.bf16.mxu0 0
        %500 = vmatpush1.bf16.xpose.msra.mxu0 %v483
        %501 = vmatprep.subr.bf16.mxu0 0
        %502 = vmatpush1.bf16.xpose.msra.mxu0 0
        %503 = vmatprep.subr.bf16.mxu0 0
        %504 = vmatpush1.bf16.xpose.msra.mxu0 0
        %505 = vmatprep.subr.bf16.mxu0 0
        %506 = vmatpush1.bf16.xpose.msra.mxu0 0
        %507 = vmatprep.subr.bf16.mxu0 0
        %508 = vmatpush1.bf16.xpose.msra.mxu0 0
        %509 = vmatprep.subr.bf16.mxu0 0
        %510 = vmatpush1.bf16.xpose.msra.mxu0 0
        %511 = vmatprep.subr.bf16.mxu0 0
        %512 = vmatpush1.bf16.xpose.msra.mxu0 0
        %513 = vmatprep.subr.bf16.mxu0 0
        %514 = vmatpush1.bf16.xpose.msra.mxu0 0
        %515 = vmatprep.subr.bf16.mxu0 0
        %516 = vmatpush1.bf16.xpose.msra.mxu0 0
        %517 = vmatprep.mubr.bf16.mxu0 0
        %518 = vmatmul.mubr.bf16.gmra.mrb[0].mxu0 %v459
        %v519 = vpop.f32.mrb[0].mxu0
        %v520 = vadd.f32 %v416, %v519
        %v521 = vpop.f32.mrb[0].mxu0
        %v522 = vpop.f32.mrb[0].mxu0
        %v523 = vpop.f32.mrb[0].mxu0
        %524 = vdwg.mxu0
        %525 = vmax.xlane.f32.xlu0 %v520
        %v526 = vpop.xlane.xlu0 %525
        %v527 = vsub.f32 %v520, %v526
        %v528 = vmul.f32 %v527, 1.442695
        %v529 = vpow.pop %v528
        %530 = vadd.xlane.f32.xlu0 %v529
        %v531 = vpop.xlane.xlu0 %530
        %v532 = vrcp.pop %v531
        %v533 = vmul.f32 1.0, %v532
        %v534 = vmul.f32 %v529, %v533
        %v535 = vpack.c.bf16 %v534, %v534
        %544 = vmatprep.subr.bf16.mxu0 0
        %545 = vmatpush1.bf16.msra.mxu0 %v450
        %546 = vmatprep.subr.bf16.mxu0 0
        %547 = vmatpush1.bf16.msra.mxu0 %v451
        %548 = vmatprep.subr.bf16.mxu0 0
        %549 = vmatpush1.bf16.msra.mxu0 %v452
        %550 = vmatprep.subr.bf16.mxu0 0
        %551 = vmatpush1.bf16.msra.mxu0 %v453
        %552 = vmatprep.subr.bf16.mxu0 0
        %553 = vmatpush1.bf16.msra.mxu0 %v454
        %554 = vmatprep.subr.bf16.mxu0 0
        %555 = vmatpush1.bf16.msra.mxu0 %v455
        %556 = vmatprep.subr.bf16.mxu0 0
        %557 = vmatpush1.bf16.msra.mxu0 %v456
        %558 = vmatprep.subr.bf16.mxu0 0
        %559 = vmatpush1.bf16.msra.mxu0 %v457
        %560 = vmatprep.subr.bf16.mxu0 0
        %561 = vmatpush1.bf16.msra.mxu0 0
        %562 = vmatprep.subr.bf16.mxu0 0
        %563 = vmatpush1.bf16.msra.mxu0 0
        %564 = vmatprep.subr.bf16.mxu0 0
        %565 = vmatpush1.bf16.msra.mxu0 0
        %566 = vmatprep.subr.bf16.mxu0 0
        %567 = vmatpush1.bf16.msra.mxu0 0
        %568 = vmatprep.subr.bf16.mxu0 0
        %569 = vmatpush1.bf16.msra.mxu0 0
        %570 = vmatprep.subr.bf16.mxu0 0
        %571 = vmatpush1.bf16.msra.mxu0 0
        %572 = vmatprep.subr.bf16.mxu0 0
        %573 = vmatpush1.bf16.msra.mxu0 0
        %574 = vmatprep.subr.bf16.mxu0 0
        %575 = vmatpush1.bf16.msra.mxu0 0
        %576 = vmatprep.mubr.bf16.mxu0 0
        %577 = vmatmul.mubr.bf16.gmra.mrb[0].mxu0 %v535
        %v578 = vpop.f32.mrb[0].mxu0
        %v579 = vadd.f32 0.0, %v578
        %v580 = vpop.f32.mrb[0].mxu0
        %v581 = vpop.f32.mrb[0].mxu0
        %v582 = vpop.f32.mrb[0].mxu0
        %583 = vdwg.mxu0
        %v584 = vpack.c.bf16 %v579, %v579
        %v585 = vld [vmem:[%s4] sm:$0xf]
        %v586 = vld [vmem:[%s4 + $0x4] sm:$0xf]
        %v587 = vld [vmem:[%s4 + $0x8] sm:$0xf]
        %v588 = vld [vmem:[%s4 + $0xc] sm:$0xf]
        %v589 = vld [vmem:[%s5] sm:$0xf]
        %v590 = vld [vmem:[%s5 + $0x4] sm:$0xf]
        %v591 = vld [vmem:[%s5 + $0x8] sm:$0xf]
        %v592 = vld [vmem:[%s5 + $0xc] sm:$0xf]
        %v597 = vunpack.c.l.b16 %v589
        %v598 = vunpack.c.l.b16 %v590
        %v599 = vunpack.c.l.b16 %v591
        %v600 = vunpack.c.l.b16 %v592
        %v601 = vpack.c.b16 %v598, %v597
        %v602 = vpack.c.b16 %v600, %v599
        %605 = vmatprep.subr.bf16.mxu0 0
        %606 = vmatpush1.bf16.msra.mxu0 %v601
        %607 = vmatprep.subr.bf16.mxu0 0
        %608 = vmatpush1.bf16.msra.mxu0 %v602
        %609 = vmatprep.subr.bf16.mxu0 0
        %610 = vmatpush1.bf16.msra.mxu0 0
        %611 = vmatprep.subr.bf16.mxu0 0
        %612 = vmatpush1.bf16.msra.mxu0 0
        %613 = vmatprep.subr.bf16.mxu0 0
        %614 = vmatpush1.bf16.msra.mxu0 0
        %615 = vmatprep.subr.bf16.mxu0 0
        %616 = vmatpush1.bf16.msra.mxu0 0
        %617 = vmatprep.subr.bf16.mxu0 0
        %618 = vmatpush1.bf16.msra.mxu0 0
        %619 = vmatprep.subr.bf16.mxu0 0
        %620 = vmatpush1.bf16.msra.mxu0 0
        %621 = vmatprep.subr.bf16.mxu0 0
        %622 = vmatpush1.bf16.msra.mxu0 0
        %623 = vmatprep.subr.bf16.mxu0 0
        %624 = vmatpush1.bf16.msra.mxu0 0
        %625 = vmatprep.subr.bf16.mxu0 0
        %626 = vmatpush1.bf16.msra.mxu0 0
        %627 = vmatprep.subr.bf16.mxu0 0
        %628 = vmatpush1.bf16.msra.mxu0 0
        %629 = vmatprep.subr.bf16.mxu0 0
        %630 = vmatpush1.bf16.msra.mxu0 0
        %631 = vmatprep.subr.bf16.mxu0 0
        %632 = vmatpush1.bf16.msra.mxu0 0
        %633 = vmatprep.subr.bf16.mxu0 0
        %634 = vmatpush1.bf16.msra.mxu0 0
        %635 = vmatprep.subr.bf16.mxu0 0
        %636 = vmatpush1.bf16.msra.mxu0 0
        %637 = vmatprep.mubr.bf16.mxu0 0
        %638 = vmatmul.mubr.bf16.gmra.mrb[0].mxu0 %v459
        %v639 = vpop.f32.mrb[0].mxu0
        %v640 = vadd.f32 0.0, %v639
        %v641 = vpop.f32.mrb[0].mxu0
        %v642 = vpop.f32.mrb[0].mxu0
        %v643 = vpop.f32.mrb[0].mxu0
        %644 = vdwg.mxu0
        %v649 = vunpack.c.l.b16 %v585
        %v650 = vunpack.c.l.b16 %v586
        %v651 = vunpack.c.l.b16 %v587
        %v652 = vunpack.c.l.b16 %v588
        %v653 = vpack.c.b16 %v650, %v649
        %v654 = vpack.c.b16 %v652, %v651
        %v658 = vsel %vm350, %v584, 0
        %660 = vmatprep.subr.bf16.mxu0 0
        %661 = vmatpush1.bf16.msra.mxu0 %v653
        %662 = vmatprep.subr.bf16.mxu0 0
        %663 = vmatpush1.bf16.msra.mxu0 %v654
        %664 = vmatprep.subr.bf16.mxu0 0
        %665 = vmatpush1.bf16.msra.mxu0 0
        %666 = vmatprep.subr.bf16.mxu0 0
        %667 = vmatpush1.bf16.msra.mxu0 0
        %668 = vmatprep.subr.bf16.mxu0 0
        %669 = vmatpush1.bf16.msra.mxu0 0
        %670 = vmatprep.subr.bf16.mxu0 0
        %671 = vmatpush1.bf16.msra.mxu0 0
        %672 = vmatprep.subr.bf16.mxu0 0
        %673 = vmatpush1.bf16.msra.mxu0 0
        %674 = vmatprep.subr.bf16.mxu0 0
        %675 = vmatpush1.bf16.msra.mxu0 0
        %676 = vmatprep.subr.bf16.mxu0 0
        %677 = vmatpush1.bf16.msra.mxu0 0
        %678 = vmatprep.subr.bf16.mxu0 0
        %679 = vmatpush1.bf16.msra.mxu0 0
        %680 = vmatprep.subr.bf16.mxu0 0
        %681 = vmatpush1.bf16.msra.mxu0 0
        %682 = vmatprep.subr.bf16.mxu0 0
        %683 = vmatpush1.bf16.msra.mxu0 0
        %684 = vmatprep.subr.bf16.mxu0 0
        %685 = vmatpush1.bf16.msra.mxu0 0
        %686 = vmatprep.subr.bf16.mxu0 0
        %687 = vmatpush1.bf16.msra.mxu0 0
        %688 = vmatprep.subr.bf16.mxu0 0
        %689 = vmatpush1.bf16.msra.mxu0 0
        %690 = vmatprep.subr.bf16.mxu0 0
        %691 = vmatpush1.bf16.msra.mxu0 0
        %692 = vmatprep.mubr.bf16.mxu0 0
        %693 = vmatmul.mubr.bf16.gmra.mrb[0].mxu0 %v658
        %v694 = vpop.f32.mrb[0].mxu0
        %v695 = vadd.f32 %v640, %v694
        %v696 = vpop.f32.mrb[0].mxu0
        %v697 = vpop.f32.mrb[0].mxu0
        %v698 = vpop.f32.mrb[0].mxu0
        %699 = vdwg.mxu0
        %v700 = vtanh.pop %v695
        %701 = vst.msk [vmem:[%s312] sm:$0xff] %vm350, %v700
        %702 = vst [vmem:[%s319] sm:$0xff] %v534
        %s703 = sand.u32 %s185, 1
        %s704 = scalar_lea.sflag [#allocation3], %s703
        %s705 = sand.u32 %s185, 1
        %s706 = smul.addr %s705, 8
        %s707 = scalar_lea.vmem [#allocation2], %s706
        %s708 = sand.u32 %s213, 1
        %s709 = scalar_lea.sflag [#allocation5], %s708
        %s710 = sand.u32 %s213, 1
        %s711 = smul.addr %s710, 8
        %s712 = scalar_lea.vmem [#allocation4], %s711
        // Predicated region
        $region45: #{tpu_custom_call.1} parent=43 // pred_check
          %p713 = pneg %p195
        $region46: #{tpu_custom_call.1} parent=43 // pred_check_branch
          %715 = sbr.rel (%p713) target = $region48
        $region47: #{tpu_custom_call.1} parent=43 // pred_region
          %s717 = ssub.s32 128, 128
          %718 = vsyncadd %s704, %s717
          %s719 = sadd.s32 %s30, %s29
          %s720 = smul.addr %s719, 128
          %s721 = scalar_lea.hbm %s6, %s720
          %s723 = sshll.u32 %s707, 4
          %s724 = int_to_ptr.vmem [resolvable:$true] %s723
          %726 = dma.vmem_to_hbm [thread:$0]  %s724, 128, %s721, %s704
        $region48: #{tpu_custom_call.1} parent=43 // pred_fallthru
          _
        // Predicated region
        $region49: #{tpu_custom_call.1} parent=43 // pred_check
          %p727 = pneg %p223
        $region50: #{tpu_custom_call.1} parent=43 // pred_check_branch
          %729 = sbr.rel (%p727) target = $region52
        $region51: #{tpu_custom_call.1} parent=43 // pred_region
          %s731 = ssub.s32 128, 128
          %732 = vsyncadd %s709, %s731
          %s733 = sadd.s32 %s30, %s29
          %s734 = smul.addr %s733, 128
          %s735 = scalar_lea.hbm %s7, %s734
          %s737 = sshll.u32 %s712, 4
          %s738 = int_to_ptr.vmem [resolvable:$true] %s737
          %740 = dma.vmem_to_hbm [thread:$0]  %s738, 128, %s735, %s709
        $region52: #{tpu_custom_call.1} parent=43 // pred_fallthru
          _
      $region44: #{tpu_custom_call.1} parent=5 // pred_fallthru
        _
      %p741 = scmp.le.s32.totalorder 2, %s20
      // Predicated region
      $region53: #{tpu_custom_call.1} parent=5 // pred_check
        %p742 = pneg %p741
      $region54: #{tpu_custom_call.1} parent=5 // pred_check_branch
        %744 = sbr.rel (%p742) target = $region56
      $region55: #{tpu_custom_call.1} parent=5 // pred_region
        %s745 = ssub.s32 %s20, 2
        // Predicated region
        $region57: #{tpu_custom_call.1} parent=55 // pred_check
          %p746 = pneg %p201
        $region58: #{tpu_custom_call.1} parent=55 // pred_check_branch
          %748 = sbr.rel (%p746) target = $region60
        $region59: #{tpu_custom_call.1} parent=55 // pred_region
          %s749 = sand.u32 %s186, 1
          %s750 = scalar_lea.sflag [#allocation3], %s749
          %s751 = sand.u32 %s186, 1
          %s752 = smul.addr %s751, 8
          %s753 = scalar_lea.vmem [#allocation2], %s752
          %754 = dma.done %s750, 128
        $region60: #{tpu_custom_call.1} parent=55 // pred_fallthru
          _
        // Predicated region
        $region61: #{tpu_custom_call.1} parent=55 // pred_check
          %p755 = pneg %p229
        $region62: #{tpu_custom_call.1} parent=55 // pred_check_branch
          %757 = sbr.rel (%p755) target = $region64
        $region63: #{tpu_custom_call.1} parent=55 // pred_region
          %s758 = sand.u32 %s214, 1
          %s759 = scalar_lea.sflag [#allocation5], %s758
          %s760 = sand.u32 %s214, 1
          %s761 = smul.addr %s760, 8
          %s762 = scalar_lea.vmem [#allocation4], %s761
          %763 = dma.done %s759, 128
        $region64: #{tpu_custom_call.1} parent=55 // pred_fallthru
          _
      $region56: #{tpu_custom_call.1} parent=5 // pred_fallthru
        _
    $region6: #{tpu_custom_call.1} parent=1 // loop_footer
      %s24 = sadd.s32 1, %s20
    $region7: #{tpu_custom_call.1} parent=1 // loop_footer_branch
      %19 = sbr.rel target = $region3
    $region8: #{tpu_custom_call.1} parent=1 // loop_exit
      _
    %764 = vsyncpa [#allocation3], 1
    %s765 = scalar_lea.sflag [#allocation3], 1
    %766 = vsyncpa %s765, 1
    %767 = vsyncpa [#allocation5], 1
    %s768 = scalar_lea.sflag [#allocation5], 1
    %769 = vsyncpa %s768, 1

</llo_original>
